<compile_context>
chip_gen: v6e
topology: v6e:2x2x1
jax: 0.10.0
libtpu: 0.0.40
codegen_flags: <defaults>
</compile_context>

<pallas_src>
import functools

import jax
import jax.numpy as jnp
from jax.experimental import pallas as pl
from jax.experimental.pallas import tpu as pltpu

NUM_ACTIONS = 25
PF_SIZE = 100
NUM_FEATURES = PF_SIZE + 1          # 101
HIDDEN = 64
HIDDEN2 = HIDDEN // 2               # 32

K_PAD = 128                         # fc1 contraction dim padded 101 -> 128
HEAD_PAD = 128                      # fused head output lanes (25 probs + 1 value + pad)
VALUE_LANE = NUM_ACTIONS            # lane index holding the critic value


def _round_up(n, m):
    return ((n + m - 1) // m) * m


def actor_critic_kernel(x_ref, w1_ref, b1_ref, w2_ref, b2_ref, wh_ref, bh_ref,
                        out_ref):
    x = x_ref[...]                                                    # [TB, 128]

    # fc1 + ReLU  (K already zero-padded to 128 on host)
    h1 = jnp.dot(x, w1_ref[...], preferred_element_type=jnp.float32) + b1_ref[...]
    h1 = jnp.maximum(h1, 0.0)                                         # [TB, 64]

    # fc2 + ReLU
    h2 = jnp.dot(h1, w2_ref[...], preferred_element_type=jnp.float32) + b2_ref[...]
    h2 = jnp.maximum(h2, 0.0)                                         # [TB, 32]

    # fused actor+critic head: lanes 0..24 = logits, lane 25 = value, rest 0
    head = jnp.dot(h2, wh_ref[...], preferred_element_type=jnp.float32) + bh_ref[...]  # [TB, 128]

    lane = jax.lax.broadcasted_iota(jnp.int32, head.shape, 1)
    is_act = lane < NUM_ACTIONS

    # softmax over the action lanes only (max-stabilized, exact divide)
    masked_logits = jnp.where(is_act, head, -jnp.inf)
    m = jnp.max(masked_logits, axis=1, keepdims=True)
    e = jnp.where(is_act, jnp.exp(head - m), 0.0)
    s = jnp.sum(e, axis=1, keepdims=True)
    probs = e / s

    # lane-dense output slab: probs in lanes 0..24, value in lane 25, zeros elsewhere
    out_ref[...] = jnp.where(is_act, probs, head)


def _pack_params(params):
    """Fuse/zero-pad parameters into MXU/lane friendly slabs (host side, one-time)."""
    w1 = params["w1"]                                                  # (101, 64)
    w1p = jnp.zeros((K_PAD, HIDDEN), jnp.float32).at[:NUM_FEATURES, :].set(w1)
    b1 = params["b1"]                                                  # (1, 64)
    w2, b2 = params["w2"], params["b2"]                                # (64,32), (1,32)

    # fused head weight/bias: (32, 128) / (1, 128); lanes 0..24 actor, 25 critic
    wh = jnp.zeros((HIDDEN2, HEAD_PAD), jnp.float32)
    wh = wh.at[:, :NUM_ACTIONS].set(params["wa"])
    wh = wh.at[:, VALUE_LANE:VALUE_LANE + 1].set(params["wc"])
    bh = jnp.zeros((1, HEAD_PAD), jnp.float32)
    bh = bh.at[:, :NUM_ACTIONS].set(params["ba"])
    bh = bh.at[:, VALUE_LANE:VALUE_LANE + 1].set(params["bc"])
    return w1p, b1, w2, b2, wh, bh


@functools.partial(jax.jit, static_argnames=("tb",))
def actor_critic_forward(x, params, *, tb=512):
    """x: [B, NUM_FEATURES] float32. Returns (probs [B,25], value [B,1])."""
    B = x.shape[0]
    w1p, b1, w2, b2, wh, bh = _pack_params(params)

    # batch tile: multiple of 8 sublanes, capped at `tb`
    TB = min(tb, _round_up(B, 8))
    pad_B = _round_up(B, TB)

    # host-side zero-pad: batch -> pad_B rows, features 101 -> 128 lanes
    xp = jnp.zeros((pad_B, K_PAD), jnp.float32).at[:B, :NUM_FEATURES].set(x)

    grid = (pad_B // TB,)
    const = lambda shape: pl.BlockSpec(shape, lambda i: (0, 0))

    out = pl.pallas_call(
        actor_critic_kernel,
        out_shape=jax.ShapeDtypeStruct((pad_B, HEAD_PAD), jnp.float32),
        grid_spec=pltpu.PrefetchScalarGridSpec(
            num_scalar_prefetch=0,
            grid=grid,
            in_specs=[
                pl.BlockSpec((TB, K_PAD), lambda i: (i, 0)),          # x tile
                const((K_PAD, HIDDEN)),                               # w1 (resident)
                const((1, HIDDEN)),                                   # b1
                const((HIDDEN, HIDDEN2)),                             # w2
                const((1, HIDDEN2)),                                  # b2
                const((HIDDEN2, HEAD_PAD)),                           # fused head W
                const((1, HEAD_PAD)),                                 # fused head b
            ],
            out_specs=pl.BlockSpec((TB, HEAD_PAD), lambda i: (i, 0)),
        ),
        compiler_params=pltpu.CompilerParams(
            dimension_semantics=("parallel",),
        ),
    )(xp, w1p, b1, w2, b2, wh, bh)

    probs = out[:B, :NUM_ACTIONS]
    value = out[:B, VALUE_LANE:VALUE_LANE + 1]
    return probs, value


def init_params(key):
    """Deterministic, PyTorch-nn.Linear-style uniform init. Weights stored as (in, out)."""
    def linear(key, fan_in, fan_out):
        k1, k2 = jax.random.split(key)
        bound = 1.0 / jnp.sqrt(fan_in)
        w = jax.random.uniform(k1, (fan_in, fan_out), jnp.float32, -bound, bound)
        b = jax.random.uniform(k2, (1, fan_out), jnp.float32, -bound, bound)
        return w, b

    k1, k2, k3, k4 = jax.random.split(key, 4)
    w1, b1 = linear(k1, NUM_FEATURES, HIDDEN)
    w2, b2 = linear(k2, HIDDEN, HIDDEN2)
    wa, ba = linear(k3, HIDDEN2, NUM_ACTIONS)
    wc, bc = linear(k4, HIDDEN2, 1)
    return {"w1": w1, "b1": b1, "w2": w2, "b2": b2,
            "wa": wa, "ba": ba, "wc": wc, "bc": bc}


def reference_forward(x, p):
    h1 = jnp.maximum(x @ p["w1"] + p["b1"], 0.0)
    h2 = jnp.maximum(h1 @ p["w2"] + p["b2"], 0.0)
    logits = h2 @ p["wa"] + p["ba"]
    probs = jax.nn.softmax(logits, axis=1)
    value = h2 @ p["wc"] + p["bc"]
    return probs, value


if __name__ == "__main__":
    key = jax.random.PRNGKey(0)
    k_param, k_x = jax.random.split(key)

    params = init_params(k_param)
    batch = 8
    x = jax.random.normal(k_x, (batch, NUM_FEATURES), jnp.float32)

    probs, value = actor_critic_forward(x, params)
    probs = jax.block_until_ready(probs)
    value = jax.block_until_ready(value)

    # sanity check vs pure-JAX reference
    ref_probs, ref_value = reference_forward(x, params)
    assert probs.shape == (batch, NUM_ACTIONS)
    assert value.shape == (batch, 1)
    assert jnp.allclose(probs, ref_probs, atol=1e-5, rtol=1e-5)
    assert jnp.allclose(value, ref_value, atol=1e-5, rtol=1e-5)
    assert jnp.allclose(jnp.sum(probs, axis=1), 1.0, atol=1e-5)

    # also exercise a batch that is not a multiple of the tile / 8
    x2 = jax.random.normal(jax.random.PRNGKey(1), (13, NUM_FEATURES), jnp.float32)
    p2, v2 = actor_critic_forward(x2, params)
    rp2, rv2 = reference_forward(x2, params)
    assert jnp.allclose(jax.block_until_ready(p2), rp2, atol=1e-5, rtol=1e-5)
    assert jnp.allclose(jax.block_until_ready(v2), rv2, atol=1e-5, rtol=1e-5)

    print("KERNEL_OK")
</pallas_src>

<mosaic_0001>
module attributes {stable_mosaic.version = 11 : i64} {
  func.func @actor_critic_kernel(%arg0: i32, %arg1: memref<8x128xf32, #tpu.memory_space<vmem>>, %arg2: memref<128x64xf32, #tpu.memory_space<vmem>>, %arg3: memref<1x64xf32, #tpu.memory_space<vmem>>, %arg4: memref<64x32xf32, #tpu.memory_space<vmem>>, %arg5: memref<1x32xf32, #tpu.memory_space<vmem>>, %arg6: memref<32x128xf32, #tpu.memory_space<vmem>>, %arg7: memref<1x128xf32, #tpu.memory_space<vmem>>, %arg8: memref<8x128xf32, #tpu.memory_space<vmem>>) attributes {dimension_semantics = [#tpu.dimension_semantics<parallel>], iteration_bounds = array<i64: 1>, scalar_prefetch = 0 : i64, scratch_operands = 0 : i64, tpu.core_type = #tpu.core_type<tc>, window_params = [{transform_indices = @transform_0, window_bounds = array<i64: 8, 128>}, {pipeline_mode = #tpu.pipeline_mode<synchronous>, transform_indices = @transform_1, window_bounds = array<i64: 128, 64>}, {pipeline_mode = #tpu.pipeline_mode<synchronous>, transform_indices = @transform_2, window_bounds = array<i64: 1, 64>}, {pipeline_mode = #tpu.pipeline_mode<synchronous>, transform_indices = @transform_3, window_bounds = array<i64: 64, 32>}, {pipeline_mode = #tpu.pipeline_mode<synchronous>, transform_indices = @transform_4, window_bounds = array<i64: 1, 32>}, {pipeline_mode = #tpu.pipeline_mode<synchronous>, transform_indices = @transform_5, window_bounds = array<i64: 32, 128>}, {pipeline_mode = #tpu.pipeline_mode<synchronous>, transform_indices = @transform_6, window_bounds = array<i64: 1, 128>}, {transform_indices = @transform_7, window_bounds = array<i64: 8, 128>}]} {
    %c0 = arith.constant 0 : index
    %c0_0 = arith.constant 0 : index
    %0 = vector.load %arg1[%c0, %c0_0] : memref<8x128xf32, #tpu.memory_space<vmem>>, vector<8x128xf32>
    %c0_1 = arith.constant 0 : index
    %c0_2 = arith.constant 0 : index
    %1 = vector.load %arg2[%c0_1, %c0_2] : memref<128x64xf32, #tpu.memory_space<vmem>>, vector<128x64xf32>
    %cst = arith.constant dense<0.000000e+00> : vector<8x64xf32>
    %2 = tpu.matmul %0, %1, %cst {dimension_numbers = #tpu.dot_dimension_numbers<[1], [0], [0], [1], [0, 0, 1, 1], [], []>} : vector<8x128xf32>, vector<128x64xf32>, vector<8x64xf32> -> vector<8x64xf32>
    %c0_3 = arith.constant 0 : index
    %c0_4 = arith.constant 0 : index
    %3 = vector.load %arg3[%c0_3, %c0_4] : memref<1x64xf32, #tpu.memory_space<vmem>>, vector<1x64xf32>
    %4 = vector.broadcast %3 : vector<1x64xf32> to vector<8x64xf32>
    %5 = arith.addf %2, %4 : vector<8x64xf32>
    %cst_5 = arith.constant 0.000000e+00 : f32
    %6 = vector.broadcast %cst_5 : f32 to vector<8x64xf32>
    %7 = arith.maximumf %5, %6 : vector<8x64xf32>
    %c0_6 = arith.constant 0 : index
    %c0_7 = arith.constant 0 : index
    %8 = vector.load %arg4[%c0_6, %c0_7] : memref<64x32xf32, #tpu.memory_space<vmem>>, vector<64x32xf32>
    %cst_8 = arith.constant dense<0.000000e+00> : vector<8x32xf32>
    %9 = tpu.matmul %7, %8, %cst_8 {dimension_numbers = #tpu.dot_dimension_numbers<[1], [0], [0], [1], [0, 0, 1, 1], [], []>} : vector<8x64xf32>, vector<64x32xf32>, vector<8x32xf32> -> vector<8x32xf32>
    %c0_9 = arith.constant 0 : index
    %c0_10 = arith.constant 0 : index
    %10 = vector.load %arg5[%c0_9, %c0_10] : memref<1x32xf32, #tpu.memory_space<vmem>>, vector<1x32xf32>
    %11 = vector.broadcast %10 : vector<1x32xf32> to vector<8x32xf32>
    %12 = arith.addf %9, %11 : vector<8x32xf32>
    %cst_11 = arith.constant 0.000000e+00 : f32
    %13 = vector.broadcast %cst_11 : f32 to vector<8x32xf32>
    %14 = arith.maximumf %12, %13 : vector<8x32xf32>
    %c0_12 = arith.constant 0 : index
    %c0_13 = arith.constant 0 : index
    %15 = vector.load %arg6[%c0_12, %c0_13] : memref<32x128xf32, #tpu.memory_space<vmem>>, vector<32x128xf32>
    %cst_14 = arith.constant dense<0.000000e+00> : vector<8x128xf32>
    %16 = tpu.matmul %14, %15, %cst_14 {dimension_numbers = #tpu.dot_dimension_numbers<[1], [0], [0], [1], [0, 0, 1, 1], [], []>} : vector<8x32xf32>, vector<32x128xf32>, vector<8x128xf32> -> vector<8x128xf32>
    %c0_15 = arith.constant 0 : index
    %c0_16 = arith.constant 0 : index
    %17 = vector.load %arg7[%c0_15, %c0_16] : memref<1x128xf32, #tpu.memory_space<vmem>>, vector<1x128xf32>
    %18 = vector.broadcast %17 : vector<1x128xf32> to vector<8x128xf32>
    %19 = arith.addf %16, %18 : vector<8x128xf32>
    %20 = tpu.iota {dimensions = array<i32: 1>} : vector<8x128xi32>
    %c25_i32 = arith.constant 25 : i32
    %21 = vector.broadcast %c25_i32 : i32 to vector<8x128xi32>
    %22 = arith.cmpi slt, %20, %21 : vector<8x128xi32>
    %cst_17 = arith.constant 0xFF800000 : f32
    %23 = vector.broadcast %cst_17 : f32 to vector<8x128xf32>
    %24 = arith.select %22, %19, %23 : vector<8x128xi1>, vector<8x128xf32>
    %cst_18 = arith.constant dense<0xFF800000> : vector<8xf32>
    %25 = vector.multi_reduction <maximumf>, %24, %cst_18 [1] : vector<8x128xf32> to vector<8xf32>
    %26 = vector.shape_cast %25 : vector<8xf32> to vector<8x1xf32>
    %27 = vector.broadcast %26 : vector<8x1xf32> to vector<8x128xf32>
    %28 = arith.subf %19, %27 : vector<8x128xf32>
    %29 = math.exp %28 : vector<8x128xf32>
    %cst_19 = arith.constant 0.000000e+00 : f32
    %30 = vector.broadcast %cst_19 : f32 to vector<8x128xf32>
    %31 = arith.select %22, %29, %30 : vector<8x128xi1>, vector<8x128xf32>
    %cst_20 = arith.constant dense<0.000000e+00> : vector<8xf32>
    %32 = vector.multi_reduction <add>, %31, %cst_20 [1] : vector<8x128xf32> to vector<8xf32>
    %33 = vector.shape_cast %32 : vector<8xf32> to vector<8x1xf32>
    %34 = vector.broadcast %33 : vector<8x1xf32> to vector<8x128xf32>
    %35 = arith.divf %31, %34 : vector<8x128xf32>
    %36 = arith.select %22, %35, %19 : vector<8x128xi1>, vector<8x128xf32>
    %c0_21 = arith.constant 0 : index
    %c0_22 = arith.constant 0 : index
    %37 = vector.load %arg8[%c0_21, %c0_22] : memref<8x128xf32, #tpu.memory_space<vmem>>, vector<8x128xf32>
    tpu.vector_store %arg8[%c0_21, %c0_22], %36 {strides = array<i32>} : memref<8x128xf32, #tpu.memory_space<vmem>>, vector<8x128xf32>,
    return
  }
  func.func @transform_0(%arg0: i32) -> (i32, i32) {
    %c0_i32 = arith.constant 0 : i32
    %c0_i32_0 = arith.constant 0 : i32
    return %arg0, %c0_i32 : i32, i32
  }
  func.func @transform_1(%arg0: i32) -> (i32, i32) {
    %c0_i32 = arith.constant 0 : i32
    %c0_i32_0 = arith.constant 0 : i32
    %c0_i32_1 = arith.constant 0 : i32
    return %c0_i32, %c0_i32_0 : i32, i32
  }
  func.func @transform_2(%arg0: i32) -> (i32, i32) {
    %c0_i32 = arith.constant 0 : i32
    %c0_i32_0 = arith.constant 0 : i32
    %c0_i32_1 = arith.constant 0 : i32
    return %c0_i32, %c0_i32_0 : i32, i32
  }
  func.func @transform_3(%arg0: i32) -> (i32, i32) {
    %c0_i32 = arith.constant 0 : i32
    %c0_i32_0 = arith.constant 0 : i32
    %c0_i32_1 = arith.constant 0 : i32
    return %c0_i32, %c0_i32_0 : i32, i32
  }
  func.func @transform_4(%arg0: i32) -> (i32, i32) {
    %c0_i32 = arith.constant 0 : i32
    %c0_i32_0 = arith.constant 0 : i32
    %c0_i32_1 = arith.constant 0 : i32
    return %c0_i32, %c0_i32_0 : i32, i32
  }
  func.func @transform_5(%arg0: i32) -> (i32, i32) {
    %c0_i32 = arith.constant 0 : i32
    %c0_i32_0 = arith.constant 0 : i32
    %c0_i32_1 = arith.constant 0 : i32
    return %c0_i32, %c0_i32_0 : i32, i32
  }
  func.func @transform_6(%arg0: i32) -> (i32, i32) {
    %c0_i32 = arith.constant 0 : i32
    %c0_i32_0 = arith.constant 0 : i32
    %c0_i32_1 = arith.constant 0 : i32
    return %c0_i32, %c0_i32_0 : i32, i32
  }
  func.func @transform_7(%arg0: i32) -> (i32, i32) {
    %c0_i32 = arith.constant 0 : i32
    %c0_i32_0 = arith.constant 0 : i32
    return %arg0, %c0_i32 : i32, i32
  }
}

</mosaic_0001>

<llo_original>
// kernel: actor_critic_forward.1
$region0: #{actor_critic_forward.1}
  #allocation0 [shape = 'u32[]', space=smem, size = 0x4, offset = 0x4, fixed_abs, tag = 'smem constant byte address 0x4 - core index']
  #allocation1 [shape = 'u32[144,128]{1,0:T(1,128)}', space=vmem, size = 0x12000, scoped, tag = 'internal scratch']
  %s0 = inlined_call_operand.vmem [shape: f32[8,128], index: 0, kind: input, shape index: {}]
  %s1 = inlined_call_operand.vmem [shape: f32[128,64], index: 1, kind: input, shape index: {}]
  %s2 = inlined_call_operand.vmem [shape: f32[1,64], index: 2, kind: input, shape index: {}]
  %s3 = inlined_call_operand.vmem [shape: f32[64,32], index: 3, kind: input, shape index: {}]
  %s4 = inlined_call_operand.vmem [shape: f32[1,32], index: 4, kind: input, shape index: {}]
  %s5 = inlined_call_operand.vmem [shape: f32[32,128], index: 5, kind: input, shape index: {}]
  %s6 = inlined_call_operand.vmem [shape: f32[1,128], index: 6, kind: input, shape index: {}]
  %s7 = inlined_call_operand.vmem [shape: f32[8,128], index: 7, kind: output, shape index: {}]
  %s8 = sld [smem:[#allocation0]]
  $region38: #{actor_critic_forward.1} parent=0
    _
  %s10 = ssub.s32 1, %s8
  %s11 = scalar_select 0, %s10, %s8
  // Predicated region
  $region2: #{actor_critic_forward.1} parent=0 // pred_check
    _
  $region3: #{actor_critic_forward.1} parent=0 // pred_check_branch
    %13 = sbr.rel (0) target = $region5
  $region4: #{actor_critic_forward.1} parent=0 // pred_region
    _
  $region5: #{actor_critic_forward.1} parent=0 // pred_fallthru
    _
  // Predicated region
  $region6: #{actor_critic_forward.1} parent=0 // pred_check
    _
  $region7: #{actor_critic_forward.1} parent=0 // pred_check_branch
    %15 = sbr.rel (0) target = $region9
  $region8: #{actor_critic_forward.1} parent=0 // pred_region
    _
  $region9: #{actor_critic_forward.1} parent=0 // pred_fallthru
    _
  // Predicated region
  $region10: #{actor_critic_forward.1} parent=0 // pred_check
    _
  $region11: #{actor_critic_forward.1} parent=0 // pred_check_branch
    %17 = sbr.rel (0) target = $region13
  $region12: #{actor_critic_forward.1} parent=0 // pred_region
    _
  $region13: #{actor_critic_forward.1} parent=0 // pred_fallthru
    _
  // Predicated region
  $region14: #{actor_critic_forward.1} parent=0 // pred_check
    _
  $region15: #{actor_critic_forward.1} parent=0 // pred_check_branch
    %19 = sbr.rel (0) target = $region17
  $region16: #{actor_critic_forward.1} parent=0 // pred_region
    _
  $region17: #{actor_critic_forward.1} parent=0 // pred_fallthru
    _
  // Predicated region
  $region18: #{actor_critic_forward.1} parent=0 // pred_check
    _
  $region19: #{actor_critic_forward.1} parent=0 // pred_check_branch
    %21 = sbr.rel (0) target = $region21
  $region20: #{actor_critic_forward.1} parent=0 // pred_region
    _
  $region21: #{actor_critic_forward.1} parent=0 // pred_fallthru
    _
  // Predicated region
  $region22: #{actor_critic_forward.1} parent=0 // pred_check
    _
  $region23: #{actor_critic_forward.1} parent=0 // pred_check_branch
    %23 = sbr.rel (0) target = $region25
  $region24: #{actor_critic_forward.1} parent=0 // pred_region
    _
  $region25: #{actor_critic_forward.1} parent=0 // pred_fallthru
    _
  // Predicated region
  $region26: #{actor_critic_forward.1} parent=0 // pred_check
    _
  $region27: #{actor_critic_forward.1} parent=0 // pred_check_branch
    %25 = sbr.rel (0) target = $region29
  $region28: #{actor_critic_forward.1} parent=0 // pred_region
    _
  $region29: #{actor_critic_forward.1} parent=0 // pred_fallthru
    _
  %v26 = vld [vmem:[%s0] sm:$0xff]
  %v27 = vld [vmem:[%s1] sm:$0xff]
  %v28 = vld [vmem:[%s1 + $0x8] sm:$0xff]
  %v29 = vld [vmem:[%s1 + $0x10] sm:$0xff]
  %v30 = vld [vmem:[%s1 + $0x18] sm:$0xff]
  %v31 = vld [vmem:[%s1 + $0x20] sm:$0xff]
  %v32 = vld [vmem:[%s1 + $0x28] sm:$0xff]
  %v33 = vld [vmem:[%s1 + $0x30] sm:$0xff]
  %v34 = vld [vmem:[%s1 + $0x38] sm:$0xff]
  %v35 = vld [vmem:[%s1 + $0x40] sm:$0xff]
  %v36 = vld [vmem:[%s1 + $0x48] sm:$0xff]
  %v37 = vld [vmem:[%s1 + $0x50] sm:$0xff]
  %v38 = vld [vmem:[%s1 + $0x58] sm:$0xff]
  %v39 = vld [vmem:[%s1 + $0x60] sm:$0xff]
  %v40 = vld [vmem:[%s1 + $0x68] sm:$0xff]
  %v41 = vld [vmem:[%s1 + $0x70] sm:$0xff]
  %v42 = vld [vmem:[%s1 + $0x78] sm:$0xff]
  %v43 = vld [vmem:[%s2] sm:$0x1]
  %v45 = vlaneseq
  %v46 = vshrl.u32 %v45, 7
  %v47 = vsub.s32 0, %v46
  %v48 = vrot.slane %v43, %v47
  %50 = vmatprep.subr.mxu0 0.0
  %51 = vmatpush1.msra.mxu0 %v42
  %52 = vmatprep.subr.mxu0 0.0
  %53 = vmatpush1.msra.mxu0 %v41
  %54 = vmatprep.subr.mxu0 0.0
  %55 = vmatpush1.msra.mxu0 %v40
  %56 = vmatprep.subr.mxu0 0.0
  %57 = vmatpush1.msra.mxu0 %v39
  %58 = vmatprep.subr.mxu0 0.0
  %59 = vmatpush1.msra.mxu0 %v38
  %60 = vmatprep.subr.mxu0 0.0
  %61 = vmatpush1.msra.mxu0 %v37
  %62 = vmatprep.subr.mxu0 0.0
  %63 = vmatpush1.msra.mxu0 %v36
  %64 = vmatprep.subr.mxu0 0.0
  %65 = vmatpush1.msra.mxu0 %v35
  %66 = vmatprep.subr.mxu0 0.0
  %67 = vmatpush1.msra.mxu0 %v34
  %68 = vmatprep.subr.mxu0 0.0
  %69 = vmatpush1.msra.mxu0 %v33
  %70 = vmatprep.subr.mxu0 0.0
  %71 = vmatpush1.msra.mxu0 %v32
  %72 = vmatprep.subr.mxu0 0.0
  %73 = vmatpush1.msra.mxu0 %v31
  %74 = vmatprep.subr.mxu0 0.0
  %75 = vmatpush1.msra.mxu0 %v30
  %76 = vmatprep.subr.mxu0 0.0
  %77 = vmatpush1.msra.mxu0 %v29
  %78 = vmatprep.subr.mxu0 0.0
  %79 = vmatpush1.msra.mxu0 %v28
  %80 = vmatprep.subr.mxu0 0.0
  %81 = vmatpush1.msra.mxu0 %v27
  %82 = vmatprep.subr.mxu0 0.0
  %83 = vmatpush2.msra.mxu0 0.0
  %84 = vmatprep.subr.mxu0 0.0
  %85 = vmatpush2.msra.mxu0 0.0
  %86 = vmatprep.subr.mxu0 0.0
  %87 = vmatpush2.msra.mxu0 0.0
  %88 = vmatprep.subr.mxu0 0.0
  %89 = vmatpush2.msra.mxu0 0.0
  %90 = vmatprep.subr.mxu0 0.0
  %91 = vmatpush2.msra.mxu0 0.0
  %92 = vmatprep.subr.mxu0 0.0
  %93 = vmatpush2.msra.mxu0 0.0
  %94 = vmatprep.subr.mxu0 0.0
  %95 = vmatpush2.msra.mxu0 0.0
  %96 = vmatprep.subr.mxu0 0.0
  %97 = vmatpush2.msra.mxu0 0.0
  %98 = vmatprep.subr.mxu0 0.0
  %99 = vmatpush2.msra.mxu0 0.0
  %100 = vmatprep.subr.mxu0 0.0
  %101 = vmatpush2.msra.mxu0 0.0
  %102 = vmatprep.subr.mxu0 0.0
  %103 = vmatpush2.msra.mxu0 0.0
  %104 = vmatprep.subr.mxu0 0.0
  %105 = vmatpush2.msra.mxu0 0.0
  %106 = vmatprep.subr.mxu0 0.0
  %107 = vmatpush2.msra.mxu0 0.0
  %108 = vmatprep.subr.mxu0 0.0
  %109 = vmatpush2.msra.mxu0 0.0
  %110 = vmatprep.subr.mxu0 0.0
  %111 = vmatpush2.msra.mxu0 0.0
  %112 = vmatprep.subr.mxu0 0.0
  %113 = vmatpush2.msra.mxu0 0.0
  %114 = vmatprep.mubr.f32.mxu0 0.0
  %115 = vmatmul.mubr.f32.gmra.mxu0 %v26
  %v116 = vpop.f32.mrf.mxu0
  %v117 = vadd.f32 %v48, %v116
  %v118 = vpop.f32.mrf.mxu0
  %119 = vdwg.mxu0
  %v120 = vmax.f32 %v117, 0.0
  %v121 = vld [vmem:[%s3] sm:$0xff]
  %v122 = vld [vmem:[%s3 + $0x8] sm:$0xff]
  %v123 = vld [vmem:[%s3 + $0x10] sm:$0xff]
  %v124 = vld [vmem:[%s3 + $0x18] sm:$0xff]
  %v125 = vld [vmem:[%s3 + $0x20] sm:$0xff]
  %v126 = vld [vmem:[%s3 + $0x28] sm:$0xff]
  %v127 = vld [vmem:[%s3 + $0x30] sm:$0xff]
  %v128 = vld [vmem:[%s3 + $0x38] sm:$0xff]
  %v129 = vld [vmem:[%s4] sm:$0x1]
  %v131 = vlaneseq
  %v132 = vshrl.u32 %v131, 7
  %v133 = vsub.s32 0, %v132
  %v134 = vrot.slane %v129, %v133
  %vm136 = vcmask 523264
  %v138 = vsel %vm136, %v120, 0
  %140 = vmatprep.subr.mxu0 0.0
  %141 = vmatpush1.msra.mxu0 0.0
  %142 = vmatprep.subr.mxu0 0.0
  %143 = vmatpush1.msra.mxu0 0.0
  %144 = vmatprep.subr.mxu0 0.0
  %145 = vmatpush1.msra.mxu0 0.0
  %146 = vmatprep.subr.mxu0 0.0
  %147 = vmatpush1.msra.mxu0 0.0
  %148 = vmatprep.subr.mxu0 0.0
  %149 = vmatpush1.msra.mxu0 0.0
  %150 = vmatprep.subr.mxu0 0.0
  %151 = vmatpush1.msra.mxu0 0.0
  %152 = vmatprep.subr.mxu0 0.0
  %153 = vmatpush1.msra.mxu0 0.0
  %154 = vmatprep.subr.mxu0 0.0
  %155 = vmatpush1.msra.mxu0 0.0
  %156 = vmatprep.subr.mxu0 0.0
  %157 = vmatpush1.msra.mxu0 %v128
  %158 = vmatprep.subr.mxu0 0.0
  %159 = vmatpush1.msra.mxu0 %v127
  %160 = vmatprep.subr.mxu0 0.0
  %161 = vmatpush1.msra.mxu0 %v126
  %162 = vmatprep.subr.mxu0 0.0
  %163 = vmatpush1.msra.mxu0 %v125
  %164 = vmatprep.subr.mxu0 0.0
  %165 = vmatpush1.msra.mxu0 %v124
  %166 = vmatprep.subr.mxu0 0.0
  %167 = vmatpush1.msra.mxu0 %v123
  %168 = vmatprep.subr.mxu0 0.0
  %169 = vmatpush1.msra.mxu0 %v122
  %170 = vmatprep.subr.mxu0 0.0
  %171 = vmatpush1.msra.mxu0 %v121
  %172 = vmatprep.subr.mxu0 0.0
  %173 = vmatpush2.msra.mxu0 0.0
  %174 = vmatprep.subr.mxu0 0.0
  %175 = vmatpush2.msra.mxu0 0.0
  %176 = vmatprep.subr.mxu0 0.0
  %177 = vmatpush2.msra.mxu0 0.0
  %178 = vmatprep.subr.mxu0 0.0
  %179 = vmatpush2.msra.mxu0 0.0
  %180 = vmatprep.subr.mxu0 0.0
  %181 = vmatpush2.msra.mxu0 0.0
  %182 = vmatprep.subr.mxu0 0.0
  %183 = vmatpush2.msra.mxu0 0.0
  %184 = vmatprep.subr.mxu0 0.0
  %185 = vmatpush2.msra.mxu0 0.0
  %186 = vmatprep.subr.mxu0 0.0
  %187 = vmatpush2.msra.mxu0 0.0
  %188 = vmatprep.subr.mxu0 0.0
  %189 = vmatpush2.msra.mxu0 0.0
  %190 = vmatprep.subr.mxu0 0.0
  %191 = vmatpush2.msra.mxu0 0.0
  %192 = vmatprep.subr.mxu0 0.0
  %193 = vmatpush2.msra.mxu0 0.0
  %194 = vmatprep.subr.mxu0 0.0
  %195 = vmatpush2.msra.mxu0 0.0
  %196 = vmatprep.subr.mxu0 0.0
  %197 = vmatpush2.msra.mxu0 0.0
  %198 = vmatprep.subr.mxu0 0.0
  %199 = vmatpush2.msra.mxu0 0.0
  %200 = vmatprep.subr.mxu0 0.0
  %201 = vmatpush2.msra.mxu0 0.0
  %202 = vmatprep.subr.mxu0 0.0
  %203 = vmatpush2.msra.mxu0 0.0
  %204 = vmatprep.mubr.f32.mxu0 0.0
  %205 = vmatmul.mubr.f32.gmra.mxu0 %v138
  %v206 = vpop.f32.mrf.mxu0
  %v207 = vadd.f32 %v134, %v206
  %v208 = vpop.f32.mrf.mxu0
  %209 = vdwg.mxu0
  %v210 = vmax.f32 %v207, 0.0
  %v211 = vld [vmem:[%s5] sm:$0xff]
  %v212 = vld [vmem:[%s5 + $0x8] sm:$0xff]
  %v213 = vld [vmem:[%s5 + $0x10] sm:$0xff]
  %v214 = vld [vmem:[%s5 + $0x18] sm:$0xff]
  %v215 = vld [vmem:[%s6] sm:$0x1]
  %v217 = vlaneseq
  %v218 = vshrl.u32 %v217, 7
  %v219 = vsub.s32 0, %v218
  %v220 = vrot.slane %v215, %v219
  %vm222 = vcmask 261120
  %v224 = vsel %vm222, %v210, 0
  %226 = vmatprep.subr.mxu0 0.0
  %227 = vmatpush1.msra.mxu0 0.0
  %228 = vmatprep.subr.mxu0 0.0
  %229 = vmatpush1.msra.mxu0 0.0
  %230 = vmatprep.subr.mxu0 0.0
  %231 = vmatpush1.msra.mxu0 0.0
  %232 = vmatprep.subr.mxu0 0.0
  %233 = vmatpush1.msra.mxu0 0.0
  %234 = vmatprep.subr.mxu0 0.0
  %235 = vmatpush1.msra.mxu0 0.0
  %236 = vmatprep.subr.mxu0 0.0
  %237 = vmatpush1.msra.mxu0 0.0
  %238 = vmatprep.subr.mxu0 0.0
  %239 = vmatpush1.msra.mxu0 0.0
  %240 = vmatprep.subr.mxu0 0.0
  %241 = vmatpush1.msra.mxu0 0.0
  %242 = vmatprep.subr.mxu0 0.0
  %243 = vmatpush1.msra.mxu0 0.0
  %244 = vmatprep.subr.mxu0 0.0
  %245 = vmatpush1.msra.mxu0 0.0
  %246 = vmatprep.subr.mxu0 0.0
  %247 = vmatpush1.msra.mxu0 0.0
  %248 = vmatprep.subr.mxu0 0.0
  %249 = vmatpush1.msra.mxu0 0.0
  %250 = vmatprep.subr.mxu0 0.0
  %251 = vmatpush1.msra.mxu0 %v214
  %252 = vmatprep.subr.mxu0 0.0
  %253 = vmatpush1.msra.mxu0 %v213
  %254 = vmatprep.subr.mxu0 0.0
  %255 = vmatpush1.msra.mxu0 %v212
  %256 = vmatprep.subr.mxu0 0.0
  %257 = vmatpush1.msra.mxu0 %v211
  %258 = vmatprep.subr.mxu0 0.0
  %259 = vmatpush2.msra.mxu0 0.0
  %260 = vmatprep.subr.mxu0 0.0
  %261 = vmatpush2.msra.mxu0 0.0
  %262 = vmatprep.subr.mxu0 0.0
  %263 = vmatpush2.msra.mxu0 0.0
  %264 = vmatprep.subr.mxu0 0.0
  %265 = vmatpush2.msra.mxu0 0.0
  %266 = vmatprep.subr.mxu0 0.0
  %267 = vmatpush2.msra.mxu0 0.0
  %268 = vmatprep.subr.mxu0 0.0
  %269 = vmatpush2.msra.mxu0 0.0
  %270 = vmatprep.subr.mxu0 0.0
  %271 = vmatpush2.msra.mxu0 0.0
  %272 = vmatprep.subr.mxu0 0.0
  %273 = vmatpush2.msra.mxu0 0.0
  %274 = vmatprep.subr.mxu0 0.0
  %275 = vmatpush2.msra.mxu0 0.0
  %276 = vmatprep.subr.mxu0 0.0
  %277 = vmatpush2.msra.mxu0 0.0
  %278 = vmatprep.subr.mxu0 0.0
  %279 = vmatpush2.msra.mxu0 0.0
  %280 = vmatprep.subr.mxu0 0.0
  %281 = vmatpush2.msra.mxu0 0.0
  %282 = vmatprep.subr.mxu0 0.0
  %283 = vmatpush2.msra.mxu0 0.0
  %284 = vmatprep.subr.mxu0 0.0
  %285 = vmatpush2.msra.mxu0 0.0
  %286 = vmatprep.subr.mxu0 0.0
  %287 = vmatpush2.msra.mxu0 0.0
  %288 = vmatprep.subr.mxu0 0.0
  %289 = vmatpush2.msra.mxu0 0.0
  %290 = vmatprep.mubr.f32.mxu0 0.0
  %291 = vmatmul.mubr.f32.gmra.mxu0 %v224
  %v292 = vpop.f32.mrf.mxu0
  %v293 = vadd.f32 %v220, %v292
  %v294 = vpop.f32.mrf.mxu0
  %295 = vdwg.mxu0
  %v296 = vlaneseq
  %v297 = vand.u32 %v296, 127
  %vm298 = vcmp.lt.s32.totalorder %v297, 25
  %v299 = vsel %vm298, %v293, -inf
  %300 = vmax.xlane.f32.xlu0 %v299
  %v301 = vpop.xlane.xlu0 %300
  %v302 = vsub.f32 %v293, %v301
  %v303 = vmul.f32 %v302, 1.442695
  %v304 = vpow.pop %v303
  %v305 = vsel %vm298, %v304, 0.0
  %306 = vadd.xlane.f32.xlu0 %v305
  %v307 = vpop.xlane.xlu0 %306
  %v308 = vrcp.pop %v307
  %v309 = vmul.f32 %v305, %v308
  %v310 = vsel %vm298, %v309, %v293
  %311 = vst [vmem:[%s7] sm:$0xff] %v310
  // Predicated region
  $region30: #{actor_critic_forward.1} parent=0 // pred_check
    _
  $region31: #{actor_critic_forward.1} parent=0 // pred_check_branch
    %313 = sbr.rel (0) target = $region33
  $region32: #{actor_critic_forward.1} parent=0 // pred_region
    _
  $region33: #{actor_critic_forward.1} parent=0 // pred_fallthru
    _
  // Predicated region
  $region34: #{actor_critic_forward.1} parent=0 // pred_check
    _
  $region35: #{actor_critic_forward.1} parent=0 // pred_check_branch
    %315 = sbr.rel (0) target = $region37
  $region36: #{actor_critic_forward.1} parent=0 // pred_region
    _
  $region37: #{actor_critic_forward.1} parent=0 // pred_fallthru
    _

</llo_original>
